<compile_context>
chip_gen: v5e
topology: v5e:2x2
jax: 0.10.0
libtpu: 0.0.40
codegen_flags: <defaults>
</compile_context>

<pallas_src>
from functools import partial

import jax
import jax.numpy as jnp
from jax.experimental import pallas as pl
from jax.experimental.pallas import tpu as pltpu

HP = 128  # lane-padded width of each LSTM gate / hidden state


def _round_up(n, m):
    return ((n + m - 1) // m) * m


def _sigmoid(z):
    # One EUP op (tanh) + cheap VPU mul/add instead of exp + divide.
    return 0.5 * jnp.tanh(0.5 * z) + 0.5


def generator_kernel(x_ref, wih_ref, wlin_ref, gate_b_ref, aux_ref, out_ref):
    # x:      (TM, D)     f32
    # wih:    (D, 3*HP)   bf16   (forget gate dropped, each gate lane-padded to HP)
    # wlin:   (HP, OP)    bf16
    # gate_b: (1, 3*HP)   f32    (b_ih + b_hh, same packing as wih)
    # aux:    (3, OP)     f32    rows = [linear bias, scale, offset]
    x = x_ref[...].astype(jnp.bfloat16)                       # bf16 x bf16 -> native MXU path
    gates = (jnp.dot(x, wih_ref[...], preferred_element_type=jnp.float32)
             + gate_b_ref[...])                               # (TM, 3*HP) f32, lane-aligned slices

    i = _sigmoid(gates[:, 0 * HP:1 * HP])                     # input gate
    g = jnp.tanh(gates[:, 1 * HP:2 * HP])                     # cell candidate
    o = _sigmoid(gates[:, 2 * HP:3 * HP])                     # output gate
    h = o * jnp.tanh(i * g)                                   # c = i*g since c0 == 0; padded lanes stay 0

    y = (jnp.dot(h.astype(jnp.bfloat16), wlin_ref[...],
                 preferred_element_type=jnp.float32)
         + aux_ref[0:1, :])                                   # (TM, OP) f32
    out_ref[...] = _sigmoid(y) * aux_ref[1:2, :] + aux_ref[2:3, :]


def pack_params(params, scale_factor, offset):
    """One-time host-side packing of parameter-derived constants. Call once, reuse."""
    D = params["w_ih_t"].shape[0]
    H = params["w_ih_t"].shape[1] // 4
    O = params["w_lin_t"].shape[1]
    OP = _round_up(O, 8)
    assert H <= HP

    w_ih = params["w_ih_t"]                        # (D, 4H), torch gate order i, f, g, o
    b_g = params["b_ih"] + params["b_hh"]          # pre-summed gate bias
    w_pack = jnp.zeros((D, 3 * HP), jnp.float32)
    b_pack = jnp.zeros((1, 3 * HP), jnp.float32)
    for dst, src in enumerate((0, 2, 3)):          # keep i, g, o; forget gate only scales c0 == 0
        w_pack = w_pack.at[:, dst * HP:dst * HP + H].set(w_ih[:, src * H:(src + 1) * H])
        b_pack = b_pack.at[:, dst * HP:dst * HP + H].set(b_g[:, src * H:(src + 1) * H])

    w_lin = jnp.zeros((HP, OP), jnp.float32).at[:H, :O].set(params["w_lin_t"])
    aux = jnp.zeros((3, OP), jnp.float32)
    aux = aux.at[0, :O].set(params["b_lin"][0])                     # linear bias
    aux = aux.at[1, :O].set(scale_factor.astype(jnp.float32))       # scale
    aux = aux.at[2, :].set(jnp.float32(offset))                     # offset

    return {
        "w_ih": w_pack.astype(jnp.bfloat16),       # bf16: the MXU input dtype
        "w_lin": w_lin.astype(jnp.bfloat16),
        "gate_b": b_pack,                          # biases / scale / offset stay f32
        "aux": aux,
    }


def _pick_tm(B):
    if B <= 256:
        return max(8, _round_up(B, 8))             # single grid step; overhead-dominated regime
    TM = 1024
    while TM > 256 and pl.cdiv(B, TM) < 2:         # keep >= 2 steps so both v7x TCs get work
        TM //= 2
    return TM


@partial(jax.jit, static_argnames=("out_dim",))
def generator_forward(x, packed, *, out_dim):
    B, D = x.shape
    OP = packed["w_lin"].shape[1]
    TM = _pick_tm(B)
    nm = pl.cdiv(B, TM)
    B_pad = nm * TM

    x_p = x.astype(jnp.float32)
    if B_pad != B:
        x_p = jnp.pad(x_p, ((0, B_pad - B), (0, 0)))     # tail-only pad, no full zero-copy

    out = pl.pallas_call(
        generator_kernel,
        out_shape=jax.ShapeDtypeStruct((B_pad, OP), jnp.float32),
        grid_spec=pltpu.PrefetchScalarGridSpec(
            num_scalar_prefetch=0,
            grid=(nm,),
            in_specs=[
                pl.BlockSpec((TM, D), lambda i: (i, 0)),         # batch rows tiled over the grid
                pl.BlockSpec((D, 3 * HP), lambda i: (0, 0)),     # weights stay VMEM-resident
                pl.BlockSpec((HP, OP), lambda i: (0, 0)),
                pl.BlockSpec((1, 3 * HP), lambda i: (0, 0)),
                pl.BlockSpec((3, OP), lambda i: (0, 0)),
            ],
            out_specs=pl.BlockSpec((TM, OP), lambda i: (i, 0)),  # narrow out: 16x less HBM writeback
        ),
        compiler_params=pltpu.CompilerParams(
            dimension_semantics=("parallel",)),                  # shards rows across both v7x TCs
    )(x_p, packed["w_ih"], packed["w_lin"], packed["gate_b"], packed["aux"])
    return out[:B, :out_dim]


def init_params(key, input_dim, hidden_dim, output_dim):
    """Deterministic synthetic params with PyTorch-default-style uniform init."""
    k = 1.0 / jnp.sqrt(jnp.float32(hidden_dim))
    keys = jax.random.split(key, 6)
    u = lambda kk, shape: jax.random.uniform(kk, shape, jnp.float32, -k, k)
    # nn.LSTM: weight_ih (4H, D), weight_hh (4H, H) [unused: h0 = 0], biases (4H,)
    # nn.Linear: weight (O, H), bias (O,)  -- all stored transposed to (in, out)
    return {
        "w_ih_t": u(keys[0], (input_dim, 4 * hidden_dim)),
        "b_ih":   u(keys[1], (1, 4 * hidden_dim)),
        "b_hh":   u(keys[2], (1, 4 * hidden_dim)),
        "w_lin_t": u(keys[3], (hidden_dim, output_dim)),
        "b_lin":  u(keys[4], (1, output_dim)),
    }


def reference_forward(x, params, scale_factor, offset, round_bf16=False):
    """Pure-JAX reference of the torch module. With round_bf16=True it rounds the
    weights AND the matmul inputs to bf16, mirroring the kernel's native MXU path."""
    H = params["w_lin_t"].shape[0]
    rnd = (lambda a: a.astype(jnp.bfloat16).astype(jnp.float32)) if round_bf16 else (lambda a: a)
    hi = jax.lax.Precision.HIGHEST
    gates = (jnp.dot(rnd(x), rnd(params["w_ih_t"]), precision=hi)
             + params["b_ih"] + params["b_hh"])
    i = jax.nn.sigmoid(gates[:, 0 * H:1 * H])
    f = jax.nn.sigmoid(gates[:, 1 * H:2 * H])          # multiplies c0 == 0
    g = jnp.tanh(gates[:, 2 * H:3 * H])
    o = jax.nn.sigmoid(gates[:, 3 * H:4 * H])
    c = f * 0.0 + i * g
    h = o * jnp.tanh(c)
    y = jnp.dot(rnd(h), rnd(params["w_lin_t"]), precision=hi) + params["b_lin"]
    return jax.nn.sigmoid(y) * scale_factor[None, :] + offset


if __name__ == "__main__":
    batch = 2
    input_dim = 8
    hidden_dim = 50
    scale_factor = jnp.array([68., 68., 68., 68., 68., 25.], dtype=jnp.float32)
    output_dim = scale_factor.shape[0]
    offset = 1.0

    key = jax.random.PRNGKey(0)
    kx, kp = jax.random.split(key)
    x = jax.random.normal(kx, (batch, input_dim), dtype=jnp.float32)
    params = init_params(kp, input_dim, hidden_dim, output_dim)

    packed = pack_params(params, scale_factor, offset)   # one-time packing, reused every call
    out = jax.block_until_ready(generator_forward(x, packed, out_dim=output_dim))

    # Apples-to-apples: reference with the same bf16 rounding of weights + matmul inputs.
    ref_bf16 = reference_forward(x, params, scale_factor, offset, round_bf16=True)
    # Full-f32 torch semantics; only bf16 rounding of weights/activations separates us.
    ref_f32 = reference_forward(x, params, scale_factor, offset)

    assert out.shape == (batch, output_dim)
    assert jnp.allclose(out, ref_bf16, atol=3e-2, rtol=1e-3), float(jnp.max(jnp.abs(out - ref_bf16)))
    assert jnp.allclose(out, ref_f32, atol=0.5, rtol=2e-2), float(jnp.max(jnp.abs(out - ref_f32)))

    print("KERNEL_OK")
</pallas_src>

<mosaic_0001>
module attributes {stable_mosaic.version = 11 : i64} {
  func.func @generator_kernel(%arg0: i32, %arg1: memref<8x8xf32, #tpu.memory_space<vmem>>, %arg2: memref<8x384xbf16, #tpu.memory_space<vmem>>, %arg3: memref<128x8xbf16, #tpu.memory_space<vmem>>, %arg4: memref<1x384xf32, #tpu.memory_space<vmem>>, %arg5: memref<3x8xf32, #tpu.memory_space<vmem>>, %arg6: memref<8x8xf32, #tpu.memory_space<vmem>>) attributes {dimension_semantics = [#tpu.dimension_semantics<parallel>], iteration_bounds = array<i64: 1>, scalar_prefetch = 0 : i64, scratch_operands = 0 : i64, tpu.core_type = #tpu.core_type<tc>, window_params = [{transform_indices = @transform_0, window_bounds = array<i64: 8, 8>}, {pipeline_mode = #tpu.pipeline_mode<synchronous>, transform_indices = @transform_1, window_bounds = array<i64: 8, 384>}, {pipeline_mode = #tpu.pipeline_mode<synchronous>, transform_indices = @transform_2, window_bounds = array<i64: 128, 8>}, {pipeline_mode = #tpu.pipeline_mode<synchronous>, transform_indices = @transform_3, window_bounds = array<i64: 1, 384>}, {pipeline_mode = #tpu.pipeline_mode<synchronous>, transform_indices = @transform_4, window_bounds = array<i64: 3, 8>}, {transform_indices = @transform_5, window_bounds = array<i64: 8, 8>}]} {
    %c0 = arith.constant 0 : index
    %c0_0 = arith.constant 0 : index
    %0 = vector.load %arg1[%c0, %c0_0] : memref<8x8xf32, #tpu.memory_space<vmem>>, vector<8x8xf32>
    %1 = arith.truncf %0 : vector<8x8xf32> to vector<8x8xbf16>
    %c0_1 = arith.constant 0 : index
    %c0_2 = arith.constant 0 : index
    %2 = vector.load %arg2[%c0_1, %c0_2] : memref<8x384xbf16, #tpu.memory_space<vmem>>, vector<8x384xbf16>
    %cst = arith.constant dense<0.000000e+00> : vector<8x384xf32>
    %3 = tpu.matmul %1, %2, %cst {dimension_numbers = #tpu.dot_dimension_numbers<[1], [0], [0], [1], [0, 0, 1, 1], [], []>} : vector<8x8xbf16>, vector<8x384xbf16>, vector<8x384xf32> -> vector<8x384xf32>
    %c0_3 = arith.constant 0 : index
    %c0_4 = arith.constant 0 : index
    %4 = vector.load %arg4[%c0_3, %c0_4] : memref<1x384xf32, #tpu.memory_space<vmem>>, vector<1x384xf32>
    %5 = vector.broadcast %4 : vector<1x384xf32> to vector<8x384xf32>
    %6 = arith.addf %3, %5 : vector<8x384xf32>
    %7 = vector.extract_strided_slice %6 {offsets = [0, 0], sizes = [8, 128], strides = [1, 1]} : vector<8x384xf32> to vector<8x128xf32>
    %cst_5 = arith.constant 5.000000e-01 : f32
    %8 = vector.broadcast %cst_5 : f32 to vector<8x128xf32>
    %9 = arith.mulf %8, %7 : vector<8x128xf32>
    %10 = math.tanh %9 : vector<8x128xf32>
    %cst_6 = arith.constant 5.000000e-01 : f32
    %11 = vector.broadcast %cst_6 : f32 to vector<8x128xf32>
    %12 = arith.mulf %11, %10 : vector<8x128xf32>
    %cst_7 = arith.constant 5.000000e-01 : f32
    %13 = vector.broadcast %cst_7 : f32 to vector<8x128xf32>
    %14 = arith.addf %12, %13 : vector<8x128xf32>
    %15 = vector.extract_strided_slice %6 {offsets = [0, 128], sizes = [8, 128], strides = [1, 1]} : vector<8x384xf32> to vector<8x128xf32>
    %16 = math.tanh %15 : vector<8x128xf32>
    %17 = vector.extract_strided_slice %6 {offsets = [0, 256], sizes = [8, 128], strides = [1, 1]} : vector<8x384xf32> to vector<8x128xf32>
    %cst_8 = arith.constant 5.000000e-01 : f32
    %18 = vector.broadcast %cst_8 : f32 to vector<8x128xf32>
    %19 = arith.mulf %18, %17 : vector<8x128xf32>
    %20 = math.tanh %19 : vector<8x128xf32>
    %cst_9 = arith.constant 5.000000e-01 : f32
    %21 = vector.broadcast %cst_9 : f32 to vector<8x128xf32>
    %22 = arith.mulf %21, %20 : vector<8x128xf32>
    %cst_10 = arith.constant 5.000000e-01 : f32
    %23 = vector.broadcast %cst_10 : f32 to vector<8x128xf32>
    %24 = arith.addf %22, %23 : vector<8x128xf32>
    %25 = arith.mulf %14, %16 : vector<8x128xf32>
    %26 = math.tanh %25 : vector<8x128xf32>
    %27 = arith.mulf %24, %26 : vector<8x128xf32>
    %28 = arith.truncf %27 : vector<8x128xf32> to vector<8x128xbf16>
    %c0_11 = arith.constant 0 : index
    %c0_12 = arith.constant 0 : index
    %29 = vector.load %arg3[%c0_11, %c0_12] : memref<128x8xbf16, #tpu.memory_space<vmem>>, vector<128x8xbf16>
    %cst_13 = arith.constant dense<0.000000e+00> : vector<8x8xf32>
    %30 = tpu.matmul %28, %29, %cst_13 {dimension_numbers = #tpu.dot_dimension_numbers<[1], [0], [0], [1], [0, 0, 1, 1], [], []>} : vector<8x128xbf16>, vector<128x8xbf16>, vector<8x8xf32> -> vector<8x8xf32>
    %c0_14 = arith.constant 0 : index
    %c0_15 = arith.constant 0 : index
    %31 = vector.load %arg5[%c0_14, %c0_15] : memref<3x8xf32, #tpu.memory_space<vmem>>, vector<1x8xf32>
    %32 = vector.broadcast %31 : vector<1x8xf32> to vector<8x8xf32>
    %33 = arith.addf %30, %32 : vector<8x8xf32>
    %cst_16 = arith.constant 5.000000e-01 : f32
    %34 = vector.broadcast %cst_16 : f32 to vector<8x8xf32>
    %35 = arith.mulf %34, %33 : vector<8x8xf32>
    %36 = math.tanh %35 : vector<8x8xf32>
    %cst_17 = arith.constant 5.000000e-01 : f32
    %37 = vector.broadcast %cst_17 : f32 to vector<8x8xf32>
    %38 = arith.mulf %37, %36 : vector<8x8xf32>
    %cst_18 = arith.constant 5.000000e-01 : f32
    %39 = vector.broadcast %cst_18 : f32 to vector<8x8xf32>
    %40 = arith.addf %38, %39 : vector<8x8xf32>
    %c1 = arith.constant 1 : index
    %c0_19 = arith.constant 0 : index
    %41 = vector.load %arg5[%c1, %c0_19] : memref<3x8xf32, #tpu.memory_space<vmem>>, vector<1x8xf32>
    %42 = vector.broadcast %41 : vector<1x8xf32> to vector<8x8xf32>
    %43 = arith.mulf %40, %42 : vector<8x8xf32>
    %c2 = arith.constant 2 : index
    %c0_20 = arith.constant 0 : index
    %44 = vector.load %arg5[%c2, %c0_20] : memref<3x8xf32, #tpu.memory_space<vmem>>, vector<1x8xf32>
    %45 = vector.broadcast %44 : vector<1x8xf32> to vector<8x8xf32>
    %46 = arith.addf %43, %45 : vector<8x8xf32>
    %c0_21 = arith.constant 0 : index
    %c0_22 = arith.constant 0 : index
    %47 = vector.load %arg6[%c0_21, %c0_22] : memref<8x8xf32, #tpu.memory_space<vmem>>, vector<8x8xf32>
    tpu.vector_store %arg6[%c0_21, %c0_22], %46 {strides = array<i32>} : memref<8x8xf32, #tpu.memory_space<vmem>>, vector<8x8xf32>,
    return
  }
  func.func @transform_0(%arg0: i32) -> (i32, i32) {
    %c0_i32 = arith.constant 0 : i32
    %c0_i32_0 = arith.constant 0 : i32
    return %arg0, %c0_i32 : i32, i32
  }
  func.func @transform_1(%arg0: i32) -> (i32, i32) {
    %c0_i32 = arith.constant 0 : i32
    %c0_i32_0 = arith.constant 0 : i32
    %c0_i32_1 = arith.constant 0 : i32
    return %c0_i32, %c0_i32_0 : i32, i32
  }
  func.func @transform_2(%arg0: i32) -> (i32, i32) {
    %c0_i32 = arith.constant 0 : i32
    %c0_i32_0 = arith.constant 0 : i32
    %c0_i32_1 = arith.constant 0 : i32
    return %c0_i32, %c0_i32_0 : i32, i32
  }
  func.func @transform_3(%arg0: i32) -> (i32, i32) {
    %c0_i32 = arith.constant 0 : i32
    %c0_i32_0 = arith.constant 0 : i32
    %c0_i32_1 = arith.constant 0 : i32
    return %c0_i32, %c0_i32_0 : i32, i32
  }
  func.func @transform_4(%arg0: i32) -> (i32, i32) {
    %c0_i32 = arith.constant 0 : i32
    %c0_i32_0 = arith.constant 0 : i32
    %c0_i32_1 = arith.constant 0 : i32
    return %c0_i32, %c0_i32_0 : i32, i32
  }
  func.func @transform_5(%arg0: i32) -> (i32, i32) {
    %c0_i32 = arith.constant 0 : i32
    %c0_i32_0 = arith.constant 0 : i32
    return %arg0, %c0_i32 : i32, i32
  }
}

</mosaic_0001>

<llo_original>
// kernel: generator_forward.1
$region0: #{generator_forward.1}
  #allocation0 [shape = 'u32[]', space=smem, size = 0x4, offset = 0x4, fixed_abs, tag = 'smem constant byte address 0x4 - core index']
  #allocation1 [shape = 'u32[72,128]{1,0:T(1,128)}', space=vmem, size = 0x9000, scoped, tag = 'internal scratch']
  %s0 = inlined_call_operand.vmem [shape: f32[8,8], index: 0, kind: input, shape index: {}]
  %s1 = inlined_call_operand.vmem [shape: bf16[8,384], index: 1, kind: input, shape index: {}]
  %s2 = inlined_call_operand.vmem [shape: bf16[128,8], index: 2, kind: input, shape index: {}]
  %s3 = inlined_call_operand.vmem [shape: f32[1,384], index: 3, kind: input, shape index: {}]
  %s4 = inlined_call_operand.vmem [shape: f32[3,8], index: 4, kind: input, shape index: {}]
  %s5 = inlined_call_operand.vmem [shape: f32[8,8], index: 5, kind: output, shape index: {}]
  %s6 = sld [smem:[#allocation0]]
  $region30: #{generator_forward.1} parent=0
    _
  %s8 = ssub.s32 1, %s6
  %s9 = scalar_select 0, %s8, %s6
  // Predicated region
  $region2: #{generator_forward.1} parent=0 // pred_check
    _
  $region3: #{generator_forward.1} parent=0 // pred_check_branch
    %11 = sbr.rel (0) target = $region5
  $region4: #{generator_forward.1} parent=0 // pred_region
    _
  $region5: #{generator_forward.1} parent=0 // pred_fallthru
    _
  // Predicated region
  $region6: #{generator_forward.1} parent=0 // pred_check
    _
  $region7: #{generator_forward.1} parent=0 // pred_check_branch
    %13 = sbr.rel (0) target = $region9
  $region8: #{generator_forward.1} parent=0 // pred_region
    _
  $region9: #{generator_forward.1} parent=0 // pred_fallthru
    _
  // Predicated region
  $region10: #{generator_forward.1} parent=0 // pred_check
    _
  $region11: #{generator_forward.1} parent=0 // pred_check_branch
    %15 = sbr.rel (0) target = $region13
  $region12: #{generator_forward.1} parent=0 // pred_region
    _
  $region13: #{generator_forward.1} parent=0 // pred_fallthru
    _
  // Predicated region
  $region14: #{generator_forward.1} parent=0 // pred_check
    _
  $region15: #{generator_forward.1} parent=0 // pred_check_branch
    %17 = sbr.rel (0) target = $region17
  $region16: #{generator_forward.1} parent=0 // pred_region
    _
  $region17: #{generator_forward.1} parent=0 // pred_fallthru
    _
  // Predicated region
  $region18: #{generator_forward.1} parent=0 // pred_check
    _
  $region19: #{generator_forward.1} parent=0 // pred_check_branch
    %19 = sbr.rel (0) target = $region21
  $region20: #{generator_forward.1} parent=0 // pred_region
    _
  $region21: #{generator_forward.1} parent=0 // pred_fallthru
    _
  %v21 = vld [vmem:[%s0] sm:$0xff]
  %v22 = vpack.c.bf16 %v21, %v21
  %v23 = vld [vmem:[%s1] sm:$0xff]
  %v24 = vld [vmem:[%s1 + $0x8] sm:$0xf]
  %v25 = vld [vmem:[%s3] sm:$0x7]
  %v27 = vperm.slane %v25, 0
  %v28 = vperm.slane %v25, 1
  %v29 = vperm.slane %v25, 2
  %v35 = vunpack.c.l.b16 %v23
  %v36 = vunpack.c.h.b16 %v23
  %v37 = vunpack.c.l.b16 %v24
  %v38 = vpack.c.b16 %v35, %v35
  %v39 = vpack.c.b16 %v36, %v36
  %v40 = vpack.c.b16 %v37, %v37
  %vm41 = vcmask 64512
  %v43 = vsel %vm41, %v22, 0
  %vm45 = vcmask 1043456
  %v47 = vsel %vm45, %v38, 0
  %v50 = vsel %vm45, %v39, 0
  %v53 = vsel %vm45, %v40, 0
  %55 = vmatpush.bf16.msra.mxu0 0
  %56 = vmatpush.bf16.msra.mxu0 0
  %57 = vmatpush.bf16.msra.mxu0 0
  %58 = vmatpush.bf16.msra.mxu0 0
  %59 = vmatpush.bf16.msra.mxu0 0
  %60 = vmatpush.bf16.msra.mxu0 0
  %61 = vmatpush.bf16.msra.mxu0 0
  %62 = vmatpush.bf16.msra.mxu0 %v47
  %63 = vmatmul.bf16.gmra.mxu0 %v43
  %v64 = vpop.f32.mrf.mxu0
  %v65 = vadd.f32 %v27, %v64
  %v66 = vpop.f32.mrf.mxu0
  %67 = vdwg.mxu0
  %68 = vmatpush.bf16.msra.mxu0 0
  %69 = vmatpush.bf16.msra.mxu0 0
  %70 = vmatpush.bf16.msra.mxu0 0
  %71 = vmatpush.bf16.msra.mxu0 0
  %72 = vmatpush.bf16.msra.mxu0 0
  %73 = vmatpush.bf16.msra.mxu0 0
  %74 = vmatpush.bf16.msra.mxu0 0
  %75 = vmatpush.bf16.msra.mxu0 %v50
  %76 = vmatmul.bf16.gmra.mxu0 %v43
  %v77 = vpop.f32.mrf.mxu0
  %v78 = vadd.f32 %v28, %v77
  %v79 = vpop.f32.mrf.mxu0
  %80 = vdwg.mxu0
  %81 = vmatpush.bf16.msra.mxu0 0
  %82 = vmatpush.bf16.msra.mxu0 0
  %83 = vmatpush.bf16.msra.mxu0 0
  %84 = vmatpush.bf16.msra.mxu0 0
  %85 = vmatpush.bf16.msra.mxu0 0
  %86 = vmatpush.bf16.msra.mxu0 0
  %87 = vmatpush.bf16.msra.mxu0 0
  %88 = vmatpush.bf16.msra.mxu0 %v53
  %89 = vmatmul.bf16.gmra.mxu0 %v43
  %v90 = vpop.f32.mrf.mxu0
  %v91 = vadd.f32 %v29, %v90
  %v92 = vpop.f32.mrf.mxu0
  %93 = vdwg.mxu0
  %v94 = vmul.f32 %v65, 0.5
  %v95 = vtanh.pop %v94
  %v96 = vmul.f32 %v95, 0.5
  %v97 = vadd.f32 %v96, 0.5
  %v98 = vtanh.pop %v78
  %v99 = vmul.f32 %v91, 0.5
  %v100 = vtanh.pop %v99
  %v101 = vmul.f32 %v100, 0.5
  %v102 = vadd.f32 %v101, 0.5
  %v103 = vmul.f32 %v97, %v98
  %v104 = vtanh.pop %v103
  %v105 = vmul.f32 %v102, %v104
  %v106 = vpack.c.bf16 %v105, %v105
  %v107 = vld [vmem:[%s2] sm:$0xf]
  %v108 = vld [vmem:[%s2 + $0x4] sm:$0xf]
  %v109 = vld [vmem:[%s2 + $0x8] sm:$0xf]
  %v110 = vld [vmem:[%s2 + $0xc] sm:$0xf]
  %v111 = vld [vmem:[%s2 + $0x10] sm:$0xf]
  %v112 = vld [vmem:[%s2 + $0x14] sm:$0xf]
  %v113 = vld [vmem:[%s2 + $0x18] sm:$0xf]
  %v114 = vld [vmem:[%s2 + $0x1c] sm:$0xf]
  %v115 = vld [vmem:[%s2 + $0x20] sm:$0xf]
  %v116 = vld [vmem:[%s2 + $0x24] sm:$0xf]
  %v117 = vld [vmem:[%s2 + $0x28] sm:$0xf]
  %v118 = vld [vmem:[%s2 + $0x2c] sm:$0xf]
  %v119 = vld [vmem:[%s2 + $0x30] sm:$0xf]
  %v120 = vld [vmem:[%s2 + $0x34] sm:$0xf]
  %v121 = vld [vmem:[%s2 + $0x38] sm:$0xf]
  %v122 = vld [vmem:[%s2 + $0x3c] sm:$0xf]
  %v123 = vld [vmem:[%s4] sm:$0x1]
  %v124 = vperm.slane %v123, 0
  %v141 = vunpack.c.l.b16 %v107
  %v142 = vunpack.c.l.b16 %v108
  %v143 = vunpack.c.l.b16 %v109
  %v144 = vunpack.c.l.b16 %v110
  %v145 = vunpack.c.l.b16 %v111
  %v146 = vunpack.c.l.b16 %v112
  %v147 = vunpack.c.l.b16 %v113
  %v148 = vunpack.c.l.b16 %v114
  %v149 = vunpack.c.l.b16 %v115
  %v150 = vunpack.c.l.b16 %v116
  %v151 = vunpack.c.l.b16 %v117
  %v152 = vunpack.c.l.b16 %v118
  %v153 = vunpack.c.l.b16 %v119
  %v154 = vunpack.c.l.b16 %v120
  %v155 = vunpack.c.l.b16 %v121
  %v156 = vunpack.c.l.b16 %v122
  %v157 = vpack.c.b16 %v142, %v141
  %v158 = vpack.c.b16 %v144, %v143
  %v159 = vpack.c.b16 %v146, %v145
  %v160 = vpack.c.b16 %v148, %v147
  %v161 = vpack.c.b16 %v150, %v149
  %v162 = vpack.c.b16 %v152, %v151
  %v163 = vpack.c.b16 %v154, %v153
  %v164 = vpack.c.b16 %v156, %v155
  %173 = vmatpush.bf16.msra.mxu0 %v164
  %174 = vmatpush.bf16.msra.mxu0 %v163
  %175 = vmatpush.bf16.msra.mxu0 %v162
  %176 = vmatpush.bf16.msra.mxu0 %v161
  %177 = vmatpush.bf16.msra.mxu0 %v160
  %178 = vmatpush.bf16.msra.mxu0 %v159
  %179 = vmatpush.bf16.msra.mxu0 %v158
  %180 = vmatpush.bf16.msra.mxu0 %v157
  %181 = vmatmul.bf16.gmra.mxu0 %v106
  %v182 = vpop.f32.mrf.mxu0
  %v183 = vadd.f32 %v124, %v182
  %v184 = vpop.f32.mrf.mxu0
  %185 = vdwg.mxu0
  %v186 = vmul.f32 %v183, 0.5
  %v187 = vtanh.pop %v186
  %v188 = vmul.f32 %v187, 0.5
  %v189 = vadd.f32 %v188, 0.5
  %v190 = vld [vmem:[%s4 + $0x1] sm:$0x1]
  %v191 = vperm.slane %v190, 0
  %v192 = vmul.f32 %v189, %v191
  %v193 = vld [vmem:[%s4 + $0x2] sm:$0x1]
  %v194 = vperm.slane %v193, 0
  %v195 = vadd.f32 %v192, %v194
  %196 = vst.msk [vmem:[%s5] sm:$0xff] %vm41, %v195
  // Predicated region
  $region22: #{generator_forward.1} parent=0 // pred_check
    _
  $region23: #{generator_forward.1} parent=0 // pred_check_branch
    %198 = sbr.rel (0) target = $region25
  $region24: #{generator_forward.1} parent=0 // pred_region
    _
  $region25: #{generator_forward.1} parent=0 // pred_fallthru
    _
  // Predicated region
  $region26: #{generator_forward.1} parent=0 // pred_check
    _
  $region27: #{generator_forward.1} parent=0 // pred_check_branch
    %200 = sbr.rel (0) target = $region29
  $region28: #{generator_forward.1} parent=0 // pred_region
    _
  $region29: #{generator_forward.1} parent=0 // pred_fallthru
    _

</llo_original>
